<compile_context>
chip_gen: v5e
topology: v5e:2x2
jax: 0.10.0
libtpu: 0.0.40
codegen_flags: <defaults>
</compile_context>

<pallas_src>
import jax
import jax.numpy as jnp
from jax import lax
from jax.experimental import pallas as pl
from jax.experimental.pallas import tpu as pltpu


def _round_up(x, m):
    return ((x + m - 1) // m) * m


def rnn_agent_kernel(
    x_ref, h_ref,            # activations: (tile, in_dim) f32, (tile, H) f32
    w1_ref, b1_ref,          # fc1: (in_dim, H) bf16, (1, H) f32
    wg_ref, bg_ref,          # fused GRU slab: (2H, GP) bf16, (1, GP) f32
    w2_ref, b2_ref,          # fc2 as a row: (1, H) f32, (1, 1) f32
    q_ref, hout_ref,         # outputs: (1, tile) f32, (tile, H) f32
):
    H = hout_ref.shape[-1]
    mdt = w1_ref.dtype                      # matmul dtype (bf16)

    h = h_ref[...]                          # f32 carried hidden state

    # fc1 + ReLU (MXU, f32 accumulate; on-core bf16 cast of the f32 input)
    a = jnp.dot(x_ref[...].astype(mdt), w1_ref[...],
                preferred_element_type=jnp.float32)
    a = jnp.maximum(a + b1_ref[...], 0.0)

    # Single fused GRU gate matmul: [a | h] @ W_slab, all gate terms in one pass.
    #   g = [ a@Wir + h@Whr + b_r | a@Wiz + h@Whz + b_z | a@Win + b_in | h@Whn + b_hn | pad ]
    ah = jnp.concatenate([a, h], axis=-1).astype(mdt)       # (tile, 2H)
    g = jnp.dot(ah, wg_ref[...], preferred_element_type=jnp.float32) + bg_ref[...]

    # One EUP sigmoid over the contiguous r|z block, then slice.
    rz = jax.nn.sigmoid(g[:, 0:2 * H])
    r = rz[:, 0:H]
    z = rz[:, H:2 * H]
    n = jnp.tanh(g[:, 2 * H:3 * H] + r * g[:, 3 * H:4 * H])
    h_new = (1.0 - z) * n + z * h

    hout_ref[...] = h_new.astype(hout_ref.dtype)

    # fc2 (H -> 1), emitted lane-dense as a (1, tile) row: w2 (1,H) @ h_new^T.
    q = lax.dot_general(w2_ref[...], h_new, (((1,), (1,)), ((), ())),
                        preferred_element_type=jnp.float32) + b2_ref[...]
    q_ref[...] = q.astype(q_ref.dtype)


def prepare_params(params, matmul_dtype=jnp.bfloat16):
    """One-time fold/concat/pad of PyTorch-layout params into kernel layout."""
    H = params["w1"].shape[1]
    gp = _round_up(4 * H, 128)              # lane-dense fused gate width
    pad = gp - 4 * H

    zero = jnp.zeros((H, H), jnp.float32)
    top = jnp.concatenate([params["wir"], params["wiz"], params["win"], zero], axis=1)
    bot = jnp.concatenate([params["whr"], params["whz"], zero, params["whn"]], axis=1)
    w_g = jnp.concatenate([top, bot], axis=0)                 # (2H, 4H)
    b_g = jnp.concatenate(
        [params["bir"] + params["bhr"],     # folded r bias
         params["biz"] + params["bhz"],     # folded z bias
         params["bin"],
         params["bhn"]], axis=1)            # (1, 4H)

    if pad:
        w_g = jnp.pad(w_g, ((0, 0), (0, pad)))
        b_g = jnp.pad(b_g, ((0, 0), (0, pad)))

    return {
        "w1": params["w1"].astype(matmul_dtype),
        "b1": params["b1"].astype(jnp.float32),
        "w_g": w_g.astype(matmul_dtype),
        "b_g": b_g.astype(jnp.float32),
        "w2_row": params["w2"].T.astype(jnp.float32),    # (1, H)
        "b2": params["b2"].astype(jnp.float32),          # (1, 1)
    }


def _choose_tiling(B, tile_b):
    """Batch tiling: minimal padding, 128-aligned tiles (lane-dense q block),
    and >= 2 grid steps for large batches so ("parallel",) can shard the grid
    across v7x's two TensorCores (harmless on single-TC v5e/v6e)."""
    nt = pl.cdiv(B, tile_b)
    if nt == 1 and B >= 512:
        nt = 2
    if nt == 1:
        tile = _round_up(B, 8)
    else:
        tile = _round_up(pl.cdiv(B, nt), 128)
        nt = pl.cdiv(B, tile)
    return tile, nt, nt * tile


def rnn_input_action_agent(inputs, hidden_state, prep, *, tile_b=1024):
    """inputs: (B, obs_dim + n_actions) f32; hidden_state: (B, H) f32."""
    B, in_dim = inputs.shape
    H = hidden_state.shape[-1]
    gp = prep["w_g"].shape[-1]

    tile, nt, b_pad = _choose_tiling(B, tile_b)

    x = inputs                                   # f32; bf16 cast happens on-core
    h_in = hidden_state.astype(jnp.float32)
    if b_pad != B:
        x = jnp.pad(x, ((0, b_pad - B), (0, 0)))
        h_in = jnp.pad(h_in, ((0, b_pad - B), (0, 0)))

    def row_spec(feat):                          # tiled over batch (sublanes)
        return pl.BlockSpec((tile, feat), lambda i: (i, 0))

    def full_spec(r, c):                         # VMEM-resident across the grid
        return pl.BlockSpec((r, c), lambda i: (0, 0))

    q_row, h = pl.pallas_call(
        rnn_agent_kernel,
        out_shape=(
            jax.ShapeDtypeStruct((1, b_pad), jnp.float32),   # lane-dense q row
            jax.ShapeDtypeStruct((b_pad, H), jnp.float32),
        ),
        grid_spec=pltpu.PrefetchScalarGridSpec(
            num_scalar_prefetch=0,
            grid=(nt,),
            in_specs=[
                row_spec(in_dim),            # x
                row_spec(H),                 # h_in
                full_spec(in_dim, H),        # w1
                full_spec(1, H),             # b1
                full_spec(2 * H, gp),        # fused GRU slab
                full_spec(1, gp),            # fused GRU bias
                full_spec(1, H),             # w2 row
                full_spec(1, 1),             # b2
            ],
            out_specs=(
                pl.BlockSpec((1, tile), lambda i: (0, i)),   # q as (1, tile)
                row_spec(H),                                 # h_out
            ),
        ),
        compiler_params=pltpu.CompilerParams(
            dimension_semantics=("parallel",),
        ),
    )(
        x, h_in,
        prep["w1"], prep["b1"],
        prep["w_g"], prep["b_g"],
        prep["w2_row"], prep["b2"],
    )

    q = q_row[0, :B, None]                       # (B, 1)
    h = h[:B]
    return q, h


# TODO(synk): for sequence rollouts, move the timestep loop inside one pallas_call
# (lax.fori_loop over T with h carried in VMEM scratch in f32, weights loaded once,
# per-step inputs streamed via a grid axis / manual DMA, input_output_aliases for
# the hidden-state writeback) to eliminate per-step launch + HBM round trips.


def init_params(key, in_dim, hidden_dim):
    """Deterministic init mirroring PyTorch default Linear/GRUCell uniform init."""
    keys = jax.random.split(key, 20)
    k = iter(keys)

    def unif(kk, shape, fan_in):
        bound = 1.0 / jnp.sqrt(jnp.float32(fan_in))
        return jax.random.uniform(kk, shape, jnp.float32, -bound, bound)

    H = hidden_dim
    p = {}
    p["w1"] = unif(next(k), (in_dim, H), in_dim)
    p["b1"] = unif(next(k), (1, H), in_dim)
    for name in ("wir", "wiz", "win", "whr", "whz", "whn"):
        p[name] = unif(next(k), (H, H), H)
    for name in ("bir", "biz", "bin", "bhr", "bhz", "bhn"):
        p[name] = unif(next(k), (1, H), H)
    p["w2"] = unif(next(k), (H, 1), H)
    p["b2"] = unif(next(k), (1, 1), H)
    return p


def reference_forward(inputs, hidden, p):
    """Pure-JAX f32 reference matching PyTorch GRUCell gate equations."""
    a = jnp.maximum(inputs @ p["w1"] + p["b1"], 0.0)
    r = jax.nn.sigmoid(a @ p["wir"] + p["bir"] + hidden @ p["whr"] + p["bhr"])
    z = jax.nn.sigmoid(a @ p["wiz"] + p["biz"] + hidden @ p["whz"] + p["bhz"])
    n = jnp.tanh(a @ p["win"] + p["bin"] + r * (hidden @ p["whn"] + p["bhn"]))
    h = (1.0 - z) * n + z * hidden
    q = h @ p["w2"] + p["b2"]
    return q, h


if __name__ == "__main__":
    # Small shapes consistent with the module: obs_dim=28, n_actions=4 -> fc1 in=32
    obs_dim = 28
    n_actions = 4
    hidden_dim = 32
    in_dim = obs_dim + n_actions

    key = jax.random.PRNGKey(0)
    k_in, k_h, k_p = jax.random.split(key, 3)
    params = init_params(k_p, in_dim, hidden_dim)
    prep = prepare_params(params, matmul_dtype=jnp.bfloat16)

    # --- test 1: tiny batch (single tile path) ------------------------------
    batch = 8
    inputs = jax.random.normal(k_in, (batch, in_dim), jnp.float32)
    hidden = jax.random.normal(k_h, (batch, hidden_dim), jnp.float32)

    q, h = rnn_input_action_agent(inputs, hidden, prep)
    q = jax.block_until_ready(q)
    h = jax.block_until_ready(h)

    q_ref, h_ref = reference_forward(inputs, hidden, params)
    assert q.shape == (batch, 1) and h.shape == (batch, hidden_dim)
    # bf16 matmul operands (f32 accumulate) -> loose-but-tight-enough tolerance.
    assert jnp.allclose(q, q_ref, atol=5e-2, rtol=5e-2), (
        f"q max err {jnp.max(jnp.abs(q - q_ref))}")
    assert jnp.allclose(h, h_ref, atol=5e-2, rtol=5e-2), (
        f"h max err {jnp.max(jnp.abs(h - h_ref))}")

    # --- test 2: multi-tile path (padding + lane-dense q blocks + parallel grid)
    batch2 = 600
    k_in2, k_h2 = jax.random.split(jax.random.PRNGKey(1))
    inputs2 = jax.random.normal(k_in2, (batch2, in_dim), jnp.float32)
    hidden2 = jax.random.normal(k_h2, (batch2, hidden_dim), jnp.float32)

    q2, h2 = rnn_input_action_agent(inputs2, hidden2, prep, tile_b=256)
    q2 = jax.block_until_ready(q2)
    h2 = jax.block_until_ready(h2)

    q2_ref, h2_ref = reference_forward(inputs2, hidden2, params)
    assert q2.shape == (batch2, 1) and h2.shape == (batch2, hidden_dim)
    assert jnp.allclose(q2, q2_ref, atol=5e-2, rtol=5e-2), (
        f"q2 max err {jnp.max(jnp.abs(q2 - q2_ref))}")
    assert jnp.allclose(h2, h2_ref, atol=5e-2, rtol=5e-2), (
        f"h2 max err {jnp.max(jnp.abs(h2 - h2_ref))}")

    print("KERNEL_OK")
</pallas_src>

<mosaic_0001>
module attributes {stable_mosaic.version = 11 : i64} {
  func.func @rnn_agent_kernel(%arg0: i32, %arg1: memref<8x32xf32, #tpu.memory_space<vmem>>, %arg2: memref<8x32xf32, #tpu.memory_space<vmem>>, %arg3: memref<32x32xbf16, #tpu.memory_space<vmem>>, %arg4: memref<1x32xf32, #tpu.memory_space<vmem>>, %arg5: memref<64x128xbf16, #tpu.memory_space<vmem>>, %arg6: memref<1x128xf32, #tpu.memory_space<vmem>>, %arg7: memref<1x32xf32, #tpu.memory_space<vmem>>, %arg8: memref<1x1xf32, #tpu.memory_space<vmem>>, %arg9: memref<1x8xf32, #tpu.memory_space<vmem>>, %arg10: memref<8x32xf32, #tpu.memory_space<vmem>>) attributes {dimension_semantics = [#tpu.dimension_semantics<parallel>], iteration_bounds = array<i64: 1>, scalar_prefetch = 0 : i64, scratch_operands = 0 : i64, tpu.core_type = #tpu.core_type<tc>, window_params = [{transform_indices = @transform_0, window_bounds = array<i64: 8, 32>}, {transform_indices = @transform_1, window_bounds = array<i64: 8, 32>}, {pipeline_mode = #tpu.pipeline_mode<synchronous>, transform_indices = @transform_2, window_bounds = array<i64: 32, 32>}, {pipeline_mode = #tpu.pipeline_mode<synchronous>, transform_indices = @transform_3, window_bounds = array<i64: 1, 32>}, {pipeline_mode = #tpu.pipeline_mode<synchronous>, transform_indices = @transform_4, window_bounds = array<i64: 64, 128>}, {pipeline_mode = #tpu.pipeline_mode<synchronous>, transform_indices = @transform_5, window_bounds = array<i64: 1, 128>}, {pipeline_mode = #tpu.pipeline_mode<synchronous>, transform_indices = @transform_6, window_bounds = array<i64: 1, 32>}, {pipeline_mode = #tpu.pipeline_mode<synchronous>, transform_indices = @transform_7, window_bounds = array<i64: 1, 1>}, {transform_indices = @transform_8, window_bounds = array<i64: 1, 8>}, {transform_indices = @transform_9, window_bounds = array<i64: 8, 32>}]} {
    %c0 = arith.constant 0 : index
    %c0_0 = arith.constant 0 : index
    %0 = vector.load %arg2[%c0, %c0_0] : memref<8x32xf32, #tpu.memory_space<vmem>>, vector<8x32xf32>
    %c0_1 = arith.constant 0 : index
    %c0_2 = arith.constant 0 : index
    %1 = vector.load %arg1[%c0_1, %c0_2] : memref<8x32xf32, #tpu.memory_space<vmem>>, vector<8x32xf32>
    %2 = arith.truncf %1 : vector<8x32xf32> to vector<8x32xbf16>
    %c0_3 = arith.constant 0 : index
    %c0_4 = arith.constant 0 : index
    %3 = vector.load %arg3[%c0_3, %c0_4] : memref<32x32xbf16, #tpu.memory_space<vmem>>, vector<32x32xbf16>
    %cst = arith.constant dense<0.000000e+00> : vector<8x32xf32>
    %4 = tpu.matmul %2, %3, %cst {dimension_numbers = #tpu.dot_dimension_numbers<[1], [0], [0], [1], [0, 0, 1, 1], [], []>} : vector<8x32xbf16>, vector<32x32xbf16>, vector<8x32xf32> -> vector<8x32xf32>
    %c0_5 = arith.constant 0 : index
    %c0_6 = arith.constant 0 : index
    %5 = vector.load %arg4[%c0_5, %c0_6] : memref<1x32xf32, #tpu.memory_space<vmem>>, vector<1x32xf32>
    %6 = vector.broadcast %5 : vector<1x32xf32> to vector<8x32xf32>
    %7 = arith.addf %4, %6 : vector<8x32xf32>
    %cst_7 = arith.constant 0.000000e+00 : f32
    %8 = vector.broadcast %cst_7 : f32 to vector<8x32xf32>
    %9 = arith.maximumf %7, %8 : vector<8x32xf32>
    %10 = tpu.concatenate %9, %0 in 1 : vector<8x32xf32>, vector<8x32xf32> -> vector<8x64xf32>
    %11 = arith.truncf %10 : vector<8x64xf32> to vector<8x64xbf16>
    %c0_8 = arith.constant 0 : index
    %c0_9 = arith.constant 0 : index
    %12 = vector.load %arg5[%c0_8, %c0_9] : memref<64x128xbf16, #tpu.memory_space<vmem>>, vector<64x128xbf16>
    %cst_10 = arith.constant dense<0.000000e+00> : vector<8x128xf32>
    %13 = tpu.matmul %11, %12, %cst_10 {dimension_numbers = #tpu.dot_dimension_numbers<[1], [0], [0], [1], [0, 0, 1, 1], [], []>} : vector<8x64xbf16>, vector<64x128xbf16>, vector<8x128xf32> -> vector<8x128xf32>
    %c0_11 = arith.constant 0 : index
    %c0_12 = arith.constant 0 : index
    %14 = vector.load %arg6[%c0_11, %c0_12] : memref<1x128xf32, #tpu.memory_space<vmem>>, vector<1x128xf32>
    %15 = vector.broadcast %14 : vector<1x128xf32> to vector<8x128xf32>
    %16 = arith.addf %13, %15 : vector<8x128xf32>
    %17 = vector.extract_strided_slice %16 {offsets = [0, 0], sizes = [8, 64], strides = [1, 1]} : vector<8x128xf32> to vector<8x64xf32>
    %18 = arith.negf %17 : vector<8x64xf32>
    %19 = math.exp %18 : vector<8x64xf32>
    %cst_13 = arith.constant 1.000000e+00 : f32
    %20 = vector.broadcast %cst_13 : f32 to vector<8x64xf32>
    %21 = arith.addf %20, %19 : vector<8x64xf32>
    %22 = arith.divf %20, %21 : vector<8x64xf32>
    %23 = vector.extract_strided_slice %22 {offsets = [0, 0], sizes = [8, 32], strides = [1, 1]} : vector<8x64xf32> to vector<8x32xf32>
    %24 = vector.extract_strided_slice %22 {offsets = [0, 32], sizes = [8, 32], strides = [1, 1]} : vector<8x64xf32> to vector<8x32xf32>
    %25 = vector.extract_strided_slice %16 {offsets = [0, 64], sizes = [8, 32], strides = [1, 1]} : vector<8x128xf32> to vector<8x32xf32>
    %26 = vector.extract_strided_slice %16 {offsets = [0, 96], sizes = [8, 32], strides = [1, 1]} : vector<8x128xf32> to vector<8x32xf32>
    %27 = arith.mulf %23, %26 : vector<8x32xf32>
    %28 = arith.addf %25, %27 : vector<8x32xf32>
    %29 = math.tanh %28 : vector<8x32xf32>
    %cst_14 = arith.constant 1.000000e+00 : f32
    %30 = vector.broadcast %cst_14 : f32 to vector<8x32xf32>
    %31 = arith.subf %30, %24 : vector<8x32xf32>
    %32 = arith.mulf %31, %29 : vector<8x32xf32>
    %33 = arith.mulf %24, %0 : vector<8x32xf32>
    %34 = arith.addf %32, %33 : vector<8x32xf32>
    %c0_15 = arith.constant 0 : index
    %c0_16 = arith.constant 0 : index
    %35 = vector.load %arg10[%c0_15, %c0_16] : memref<8x32xf32, #tpu.memory_space<vmem>>, vector<8x32xf32>
    tpu.vector_store %arg10[%c0_15, %c0_16], %34 {strides = array<i32>} : memref<8x32xf32, #tpu.memory_space<vmem>>, vector<8x32xf32>,
    %c0_17 = arith.constant 0 : index
    %c0_18 = arith.constant 0 : index
    %36 = vector.load %arg7[%c0_17, %c0_18] : memref<1x32xf32, #tpu.memory_space<vmem>>, vector<1x32xf32>
    %cst_19 = arith.constant dense<0.000000e+00> : vector<1x8xf32>
    %37 = tpu.matmul %36, %34, %cst_19 {dimension_numbers = #tpu.dot_dimension_numbers<[1], [1], [0], [0], [0, 0, 1, 0], [], []>} : vector<1x32xf32>, vector<8x32xf32>, vector<1x8xf32> -> vector<1x8xf32>
    %c0_20 = arith.constant 0 : index
    %c0_21 = arith.constant 0 : index
    %38 = vector.load %arg8[%c0_20, %c0_21] : memref<1x1xf32, #tpu.memory_space<vmem>>, vector<1x1xf32>
    %39 = vector.broadcast %38 : vector<1x1xf32> to vector<1x8xf32>
    %40 = arith.addf %37, %39 : vector<1x8xf32>
    %c0_22 = arith.constant 0 : index
    %c0_23 = arith.constant 0 : index
    %41 = vector.load %arg9[%c0_22, %c0_23] : memref<1x8xf32, #tpu.memory_space<vmem>>, vector<1x8xf32>
    tpu.vector_store %arg9[%c0_22, %c0_23], %40 {strides = array<i32>} : memref<1x8xf32, #tpu.memory_space<vmem>>, vector<1x8xf32>,
    return
  }
  func.func @transform_0(%arg0: i32) -> (i32, i32) {
    %c0_i32 = arith.constant 0 : i32
    %c0_i32_0 = arith.constant 0 : i32
    return %arg0, %c0_i32 : i32, i32
  }
  func.func @transform_1(%arg0: i32) -> (i32, i32) {
    %c0_i32 = arith.constant 0 : i32
    %c0_i32_0 = arith.constant 0 : i32
    return %arg0, %c0_i32 : i32, i32
  }
  func.func @transform_2(%arg0: i32) -> (i32, i32) {
    %c0_i32 = arith.constant 0 : i32
    %c0_i32_0 = arith.constant 0 : i32
    %c0_i32_1 = arith.constant 0 : i32
    return %c0_i32, %c0_i32_0 : i32, i32
  }
  func.func @transform_3(%arg0: i32) -> (i32, i32) {
    %c0_i32 = arith.constant 0 : i32
    %c0_i32_0 = arith.constant 0 : i32
    %c0_i32_1 = arith.constant 0 : i32
    return %c0_i32, %c0_i32_0 : i32, i32
  }
  func.func @transform_4(%arg0: i32) -> (i32, i32) {
    %c0_i32 = arith.constant 0 : i32
    %c0_i32_0 = arith.constant 0 : i32
    %c0_i32_1 = arith.constant 0 : i32
    return %c0_i32, %c0_i32_0 : i32, i32
  }
  func.func @transform_5(%arg0: i32) -> (i32, i32) {
    %c0_i32 = arith.constant 0 : i32
    %c0_i32_0 = arith.constant 0 : i32
    %c0_i32_1 = arith.constant 0 : i32
    return %c0_i32, %c0_i32_0 : i32, i32
  }
  func.func @transform_6(%arg0: i32) -> (i32, i32) {
    %c0_i32 = arith.constant 0 : i32
    %c0_i32_0 = arith.constant 0 : i32
    %c0_i32_1 = arith.constant 0 : i32
    return %c0_i32, %c0_i32_0 : i32, i32
  }
  func.func @transform_7(%arg0: i32) -> (i32, i32) {
    %c0_i32 = arith.constant 0 : i32
    %c0_i32_0 = arith.constant 0 : i32
    %c0_i32_1 = arith.constant 0 : i32
    return %c0_i32, %c0_i32_0 : i32, i32
  }
  func.func @transform_8(%arg0: i32) -> (i32, i32) {
    %c0_i32 = arith.constant 0 : i32
    %c0_i32_0 = arith.constant 0 : i32
    return %c0_i32, %arg0 : i32, i32
  }
  func.func @transform_9(%arg0: i32) -> (i32, i32) {
    %c0_i32 = arith.constant 0 : i32
    %c0_i32_0 = arith.constant 0 : i32
    return %arg0, %c0_i32 : i32, i32
  }
}

</mosaic_0001>

<llo_original>
// kernel: tpu_custom_call.1
$region0: #{tpu_custom_call.1}
  #allocation0 [shape = 'u32[]', space=smem, size = 0x4, offset = 0x4, fixed_abs, tag = 'smem constant byte address 0x4 - core index']
  #allocation1 [shape = 'u32[72,128]{1,0:T(1,128)}', space=vmem, size = 0x9000, scoped, tag = 'internal scratch']
  #allocation2 [shape = 'f32[1,1]{1,0:T(1,128)S(1)}', space=vmem, size = 0x200, scoped, tag = 'scoped memory for tpu_custom_call.1']
  %s0 = inlined_call_operand.hbm [shape: f32[8,32], index: 0, kind: input, shape index: {}]
  %s1 = inlined_call_operand.hbm [shape: f32[8,32], index: 1, kind: input, shape index: {}]
  %s2 = inlined_call_operand.hbm [shape: bf16[32,32], index: 2, kind: input, shape index: {}]
  %s3 = inlined_call_operand.vmem [shape: f32[1,32], index: 3, kind: input, shape index: {}]
  %s4 = inlined_call_operand.hbm [shape: bf16[64,128], index: 4, kind: input, shape index: {}]
  %s5 = inlined_call_operand.vmem [shape: f32[1,128], index: 5, kind: input, shape index: {}]
  %s6 = inlined_call_operand.vmem [shape: f32[1,32], index: 6, kind: input, shape index: {}]
  %s7 = inlined_call_operand.<no memory space> [shape: f32[1,1], index: 7, kind: input, shape index: {}]
  %s8 = inlined_call_operand.hbm [shape: f32[1,8], index: 8, kind: output, shape index: {0}]
  %s9 = inlined_call_operand.hbm [shape: f32[8,32], index: 9, kind: output, shape index: {1}]
  %10 = xla_tuple %s8, %s9
  %s11 = sld [smem:[#allocation0]]
  $region66: #{tpu_custom_call.1} parent=0
    _
  %s13 = ssub.s32 1, %s11
  %s14 = scalar_select 0, %s13, %s11
  %v15 = vstv %s7
  %16 = vst [vmem:[#allocation2] sm:$0x1] %v15
  $region1: #{tpu_custom_call.1} parent=0
    #allocation3 [shape = 'u8[4096]{0}', space=vmem, size = 0x1000, scoped, tag = 'input window, operand 0, single buffered']
    #allocation4 [shape = 's32[1]{0}', space=sflag, size = 0x4, scoped, tag = 'scoped memory for tpu_custom_call.1']
    #allocation5 [shape = 's32[1]{0}', space=sflag, size = 0x4, scoped, tag = 'scoped memory for tpu_custom_call.1']
    #allocation6 [shape = 'u8[4096]{0}', space=vmem, size = 0x1000, scoped, tag = 'input window, operand 1, single buffered']
    #allocation7 [shape = 's32[1]{0}', space=sflag, size = 0x4, scoped, tag = 'scoped memory for tpu_custom_call.1']
    #allocation8 [shape = 'u8[8192]{0}', space=vmem, size = 0x2000, scoped, tag = 'input window, operand 2, single buffered']
    #allocation9 [shape = 'u8[16384]{0}', space=vmem, size = 0x4000, scoped, tag = 'input window, operand 4, single buffered']
    #allocation10 [shape = 's32[1]{0}', space=sflag, size = 0x4, scoped, tag = 'scoped memory for tpu_custom_call.1']
    #allocation11 [shape = 'u8[512]{0}', space=vmem, size = 0x400, scoped, tag = 'output window, operand 0, single buffered']
    #allocation12 [shape = 'u8[4096]{0}', space=vmem, size = 0x1000, scoped, tag = 'output window, operand 1, single buffered']
    #allocation13 [shape = 's32[1]{0}', space=sflag, size = 0x4, scoped, tag = 'scoped memory for tpu_custom_call.1']
    %17 = vsyncpa [#allocation4], 0
    %18 = vsyncpa [#allocation7], 0
    %19 = vsyncpa [#allocation10], 0
    %20 = vsyncpa [#allocation5], 0
    %21 = vsyncpa [#allocation13], 0
    // Predicated region
    $region2: #{tpu_custom_call.1} parent=1 // pred_check
      _
    $region3: #{tpu_custom_call.1} parent=1 // pred_check_branch
      %23 = sbr.rel (0) target = $region5
    $region4: #{tpu_custom_call.1} parent=1 // pred_region
      %25 = vsyncadd [#allocation4], 0
      %s27 = sshll.u32 %s0, 4
      %s28 = int_to_ptr.hbm [resolvable:$true] %s27
      %s29 = sshll.u32 [#allocation3], 4
      %s30 = int_to_ptr.vmem [resolvable:$true] %s29
      %32 = dma.hbm_to_vmem [thread:$0]  %s28, 128, %s30, [#allocation4]
    $region5: #{tpu_custom_call.1} parent=1 // pred_fallthru
      _
    // Predicated region
    $region6: #{tpu_custom_call.1} parent=1 // pred_check
      _
    $region7: #{tpu_custom_call.1} parent=1 // pred_check_branch
      %34 = sbr.rel (0) target = $region9
    $region8: #{tpu_custom_call.1} parent=1 // pred_region
      %36 = vsyncadd [#allocation7], 0
      %s38 = sshll.u32 %s1, 4
      %s39 = int_to_ptr.hbm [resolvable:$true] %s38
      %s40 = sshll.u32 [#allocation6], 4
      %s41 = int_to_ptr.vmem [resolvable:$true] %s40
      %43 = dma.hbm_to_vmem [thread:$0]  %s39, 128, %s41, [#allocation7]
    $region9: #{tpu_custom_call.1} parent=1 // pred_fallthru
      _
    // Predicated region
    $region10: #{tpu_custom_call.1} parent=1 // pred_check
      _
    $region11: #{tpu_custom_call.1} parent=1 // pred_check_branch
      %45 = sbr.rel (0) target = $region13
    $region12: #{tpu_custom_call.1} parent=1 // pred_region
      %47 = vsyncadd [#allocation7], 0
      %s48 = sshll.u32 %s2, 4
      %s49 = int_to_ptr.hbm [resolvable:$true] %s48
      %s50 = sshll.u32 [#allocation8], 4
      %s51 = int_to_ptr.vmem [resolvable:$true] %s50
      %56 = dma.hbm_to_vmem [thread:$0]  %s49, 256, %s51, [#allocation7], 64, 64, 4
    $region13: #{tpu_custom_call.1} parent=1 // pred_fallthru
      _
    // Predicated region
    $region14: #{tpu_custom_call.1} parent=1 // pred_check
      _
    $region15: #{tpu_custom_call.1} parent=1 // pred_check_branch
      %58 = sbr.rel (0) target = $region17
    $region16: #{tpu_custom_call.1} parent=1 // pred_region
      _
    $region17: #{tpu_custom_call.1} parent=1 // pred_fallthru
      _
    // Predicated region
    $region18: #{tpu_custom_call.1} parent=1 // pred_check
      _
    $region19: #{tpu_custom_call.1} parent=1 // pred_check_branch
      %60 = sbr.rel (0) target = $region21
    $region20: #{tpu_custom_call.1} parent=1 // pred_region
      %62 = vsyncadd [#allocation10], 0
      %s63 = sshll.u32 %s4, 4
      %s64 = int_to_ptr.hbm [resolvable:$true] %s63
      %s65 = sshll.u32 [#allocation9], 4
      %s66 = int_to_ptr.vmem [resolvable:$true] %s65
      %71 = dma.hbm_to_vmem [thread:$0]  %s64, 512, %s66, [#allocation10], 64, 64, 4
    $region21: #{tpu_custom_call.1} parent=1 // pred_fallthru
      _
    // Predicated region
    $region22: #{tpu_custom_call.1} parent=1 // pred_check
      _
    $region23: #{tpu_custom_call.1} parent=1 // pred_check_branch
      %73 = sbr.rel (0) target = $region25
    $region24: #{tpu_custom_call.1} parent=1 // pred_region
      _
    $region25: #{tpu_custom_call.1} parent=1 // pred_fallthru
      _
    // Predicated region
    $region26: #{tpu_custom_call.1} parent=1 // pred_check
      _
    $region27: #{tpu_custom_call.1} parent=1 // pred_check_branch
      %75 = sbr.rel (0) target = $region29
    $region28: #{tpu_custom_call.1} parent=1 // pred_region
      _
    $region29: #{tpu_custom_call.1} parent=1 // pred_fallthru
      _
    // Predicated region
    $region30: #{tpu_custom_call.1} parent=1 // pred_check
      _
    $region31: #{tpu_custom_call.1} parent=1 // pred_check_branch
      %77 = sbr.rel (0) target = $region33
    $region32: #{tpu_custom_call.1} parent=1 // pred_region
      _
    $region33: #{tpu_custom_call.1} parent=1 // pred_fallthru
      _
    // Predicated region
    $region34: #{tpu_custom_call.1} parent=1 // pred_check
      _
    $region35: #{tpu_custom_call.1} parent=1 // pred_check_branch
      %79 = sbr.rel (0) target = $region37
    $region36: #{tpu_custom_call.1} parent=1 // pred_region
      %81 = dma.done [#allocation4], 128
    $region37: #{tpu_custom_call.1} parent=1 // pred_fallthru
      _
    // Predicated region
    $region38: #{tpu_custom_call.1} parent=1 // pred_check
      _
    $region39: #{tpu_custom_call.1} parent=1 // pred_check_branch
      %83 = sbr.rel (0) target = $region41
    $region40: #{tpu_custom_call.1} parent=1 // pred_region
      %85 = dma.done [#allocation7], 128
    $region41: #{tpu_custom_call.1} parent=1 // pred_fallthru
      _
    // Predicated region
    $region42: #{tpu_custom_call.1} parent=1 // pred_check
      _
    $region43: #{tpu_custom_call.1} parent=1 // pred_check_branch
      %87 = sbr.rel (0) target = $region45
    $region44: #{tpu_custom_call.1} parent=1 // pred_region
      %89 = dma.done [#allocation7], 256
    $region45: #{tpu_custom_call.1} parent=1 // pred_fallthru
      _
    // Predicated region
    $region46: #{tpu_custom_call.1} parent=1 // pred_check
      _
    $region47: #{tpu_custom_call.1} parent=1 // pred_check_branch
      %91 = sbr.rel (0) target = $region49
    $region48: #{tpu_custom_call.1} parent=1 // pred_region
      %93 = dma.done [#allocation10], 512
    $region49: #{tpu_custom_call.1} parent=1 // pred_fallthru
      _
    %v95 = vld [vmem:[#allocation6] sm:$0xff]
    %v96 = vld [vmem:[#allocation3] sm:$0xff]
    %v97 = vpack.c.bf16 %v96, %v96
    %v98 = vld [vmem:[#allocation8] sm:$0xf]
    %v99 = vld [vmem:[#allocation8 + $0x4] sm:$0xf]
    %v100 = vld [vmem:[#allocation8 + $0x8] sm:$0xf]
    %v101 = vld [vmem:[#allocation8 + $0xc] sm:$0xf]
    %v102 = vld [vmem:[%s3] sm:$0x1]
    %v104 = vperm.slane %v102, 0
    %v110 = vunpack.c.l.b16 %v98
    %v111 = vunpack.c.l.b16 %v99
    %v112 = vunpack.c.l.b16 %v100
    %v113 = vunpack.c.l.b16 %v101
    %v114 = vpack.c.b16 %v111, %v110
    %v115 = vpack.c.b16 %v113, %v112
    %vm118 = vcmask 261120
    %v120 = vsel %vm118, %v97, 0
    %122 = vmatpush.bf16.msra.mxu0 0
    %123 = vmatpush.bf16.msra.mxu0 0
    %124 = vmatpush.bf16.msra.mxu0 0
    %125 = vmatpush.bf16.msra.mxu0 0
    %126 = vmatpush.bf16.msra.mxu0 0
    %127 = vmatpush.bf16.msra.mxu0 0
    %128 = vmatpush.bf16.msra.mxu0 %v115
    %129 = vmatpush.bf16.msra.mxu0 %v114
    %130 = vmatmul.bf16.gmra.mxu0 %v120
    %v131 = vpop.f32.mrf.mxu0
    %v132 = vadd.f32 %v104, %v131
    %v133 = vpop.f32.mrf.mxu0
    %134 = vdwg.mxu0
    %v135 = vmax.f32 %v132, 0.0
    %137 = vrot.lane.b32.xlu0 %v95, 32
    %v138 = vpop.permute.xlu0 %137
    %v140 = vsel %vm118, %v135, %v138
    %v141 = vpack.c.bf16 %v140, %v140
    %v142 = vld [vmem:[#allocation9] sm:$0xf]
    %v143 = vld [vmem:[#allocation9 + $0x4] sm:$0xf]
    %v144 = vld [vmem:[#allocation9 + $0x8] sm:$0xf]
    %v145 = vld [vmem:[#allocation9 + $0xc] sm:$0xf]
    %v146 = vld [vmem:[#allocation9 + $0x10] sm:$0xf]
    %v147 = vld [vmem:[#allocation9 + $0x14] sm:$0xf]
    %v148 = vld [vmem:[#allocation9 + $0x18] sm:$0xf]
    %v149 = vld [vmem:[#allocation9 + $0x1c] sm:$0xf]
    %v150 = vld [vmem:[%s5] sm:$0x1]
    %v152 = vperm.slane %v150, 0
    %v162 = vunpack.c.l.b16 %v142
    %v163 = vunpack.c.l.b16 %v143
    %v164 = vunpack.c.l.b16 %v144
    %v165 = vunpack.c.l.b16 %v145
    %v166 = vunpack.c.l.b16 %v146
    %v167 = vunpack.c.l.b16 %v147
    %v168 = vunpack.c.l.b16 %v148
    %v169 = vunpack.c.l.b16 %v149
    %v170 = vpack.c.b16 %v163, %v162
    %v171 = vpack.c.b16 %v165, %v164
    %v172 = vpack.c.b16 %v167, %v166
    %v173 = vpack.c.b16 %v169, %v168
    %vm178 = vcmask 523264
    %v180 = vsel %vm178, %v141, 0
    %182 = vmatpush.bf16.msra.mxu0 0
    %183 = vmatpush.bf16.msra.mxu0 0
    %184 = vmatpush.bf16.msra.mxu0 0
    %185 = vmatpush.bf16.msra.mxu0 0
    %186 = vmatpush.bf16.msra.mxu0 %v173
    %187 = vmatpush.bf16.msra.mxu0 %v172
    %188 = vmatpush.bf16.msra.mxu0 %v171
    %189 = vmatpush.bf16.msra.mxu0 %v170
    %190 = vmatmul.bf16.gmra.mxu0 %v180
    %v191 = vpop.f32.mrf.mxu0
    %v192 = vadd.f32 %v152, %v191
    %v193 = vpop.f32.mrf.mxu0
    %194 = vdwg.mxu0
    %v195 = vxor.u32 %v192, 2147483648
    %v196 = vmul.f32 %v195, 1.442695
    %v197 = vpow.pop %v196
    %v198 = vadd.f32 %v197, 1.0
    %v199 = vrcp.pop %v198
    %v200 = vmul.f32 %v198, %v199
    %v201 = vsub.f32 1.0, %v200
    %v202 = vmul.f32 %v199, %v201
    %v203 = vadd.f32 %v199, %v202
    %vm204 = vweird.f32 %v198
    %vm205 = vweird.f32 %v199
    %vm206 = vmor %vm204, %vm205
    %v207 = vsel %vm206, %v199, %v203
    %v208 = vand.u32 2147483647, %v198
    %vm209 = vcmp.eq.f32.partialorder %v208, 8.507059e+37
    %v210 = vand.u32 %v198, 2147483648
    %v211 = vor.u32 1.1754944e-38, %v210
    %v212 = vsel %vm209, %v211, %v207
    %v213 = vmul.f32 1.0, %v212
    %215 = vrot.lane.b32.xlu0 %v192, 32
    %v216 = vpop.permute.xlu0 %215
    %v218 = vmul.f32 %v213, %v216
    %220 = vrot.lane.b32.xlu0 %v218, 64
    %v221 = vpop.permute.xlu0 %220
    %v223 = vadd.f32 %v192, %v221
    %v224 = vtanh.pop %v223
    %v225 = vsub.f32 1.0, %v213
    %227 = vrot.lane.b32.xlu0 %v224, 96
    %v228 = vpop.permute.xlu0 %227
    %v230 = vmul.f32 %v225, %v228
    %v231 = vmul.f32 %v213, %v138
    %v232 = vadd.f32 %v230, %v231
    %234 = vrot.lane.b32.xlu0 %v232, 96
    %v235 = vpop.permute.xlu0 %234
    %237 = vst.msk [vmem:[#allocation12] sm:$0xff] %vm118, %v235
    %v238 = vld [vmem:[%s6] sm:$0x1]
    %v239 = vld [vmem:[#allocation2] sm:$0x1]
    %241 = vset.pattern.permute.xlu0 0
    %242 = vperm.xlu0 %241, %v239
    %v243 = vpop.permute.xlu0 %242
    %v245 = vperm.slane %v243, 0
    %v247 = vsel %vm118, %v238, 0
    %v249 = vsel %vm118, %v235, 0
    %251 = vmatpush.xpose.msra.mxu0 0.0
    %252 = vmatpush.xpose.msra.mxu0 0.0
    %253 = vmatpush.xpose.msra.mxu0 0.0
    %254 = vmatpush.xpose.msra.mxu0 0.0
    %255 = vmatpush.xpose.msra.mxu0 0.0
    %256 = vmatpush.xpose.msra.mxu0 0.0
    %257 = vmatpush.xpose.msra.mxu0 0.0
    %258 = vmatpush.xpose.msra.mxu0 0.0
    %259 = vmatpush.xpose.msra.mxu0 0.0
    %260 = vmatpush.xpose.msra.mxu0 0.0
    %261 = vmatpush.xpose.msra.mxu0 0.0
    %262 = vmatpush.xpose.msra.mxu0 0.0
    %263 = vmatpush.xpose.msra.mxu0 0.0
    %264 = vmatpush.xpose.msra.mxu0 0.0
    %265 = vmatpush.xpose.msra.mxu0 0.0
    %266 = vmatpush.xpose.msra.mxu0 %v249
    %267 = vmatmul.f32.gmra.mxu0 %v247
    %v268 = vpop.f32.mrf.mxu0
    %v269 = vadd.f32 %v245, %v268
    %270 = vdwg.mxu0
    %vm271 = vcmask 57344
    %272 = vst.msk [vmem:[#allocation11] sm:$0x1] %vm271, %v269
    // Predicated region
    $region50: #{tpu_custom_call.1} parent=1 // pred_check
      _
    $region51: #{tpu_custom_call.1} parent=1 // pred_check_branch
      %274 = sbr.rel (0) target = $region53
    $region52: #{tpu_custom_call.1} parent=1 // pred_region
      %276 = vsyncadd [#allocation5], 0
      %s278 = sshll.u32 [#allocation11], 4
      %s279 = int_to_ptr.vmem [resolvable:$true] %s278
      %s280 = sshll.u32 %s8, 4
      %s281 = int_to_ptr.hbm [resolvable:$true] %s280
      %283 = dma.vmem_to_hbm [thread:$0]  %s279, 16, %s281, [#allocation5]
    $region53: #{tpu_custom_call.1} parent=1 // pred_fallthru
      _
    // Predicated region
    $region54: #{tpu_custom_call.1} parent=1 // pred_check
      _
    $region55: #{tpu_custom_call.1} parent=1 // pred_check_branch
      %285 = sbr.rel (0) target = $region57
    $region56: #{tpu_custom_call.1} parent=1 // pred_region
      %287 = vsyncadd [#allocation13], 0
      %s289 = sshll.u32 [#allocation12], 4
      %s290 = int_to_ptr.vmem [resolvable:$true] %s289
      %s291 = sshll.u32 %s9, 4
      %s292 = int_to_ptr.hbm [resolvable:$true] %s291
      %294 = dma.vmem_to_hbm [thread:$0]  %s290, 128, %s292, [#allocation13]
    $region57: #{tpu_custom_call.1} parent=1 // pred_fallthru
      _
    // Predicated region
    $region58: #{tpu_custom_call.1} parent=1 // pred_check
      _
    $region59: #{tpu_custom_call.1} parent=1 // pred_check_branch
      %296 = sbr.rel (0) target = $region61
    $region60: #{tpu_custom_call.1} parent=1 // pred_region
      %298 = dma.done [#allocation5], 16
    $region61: #{tpu_custom_call.1} parent=1 // pred_fallthru
      _
    // Predicated region
    $region62: #{tpu_custom_call.1} parent=1 // pred_check
      _
    $region63: #{tpu_custom_call.1} parent=1 // pred_check_branch
      %300 = sbr.rel (0) target = $region65
    $region64: #{tpu_custom_call.1} parent=1 // pred_region
      %302 = dma.done [#allocation13], 128
    $region65: #{tpu_custom_call.1} parent=1 // pred_fallthru
      _
    %303 = vsyncpa [#allocation4], 1
    %304 = vsyncpa [#allocation7], 1
    %305 = vsyncpa [#allocation10], 1
    %306 = vsyncpa [#allocation5], 1
    %307 = vsyncpa [#allocation13], 1

</llo_original>
